<compile_context>
chip_gen: v6e
topology: v6e:2x2x1
jax: 0.10.0
libtpu: 0.0.40
codegen_flags: <defaults>
</compile_context>

<pallas_src>
import functools

import jax
import jax.numpy as jnp
import numpy as np
from jax import lax
from jax.experimental import pallas as pl
from jax.experimental.pallas import tpu as pltpu

EPSILON = 1e-5


# ----------------------------- fused kernel (path A) ------------------------
def _adain_kernel(c_ref, s_ref, o_ref, *, hw_c, hw_s, eps):
    """Per-row (= per (n, c)) AdaIN in one pass.

    c_ref: (bm, HWc) content rows, s_ref: (bm, HWs) style rows,
    o_ref: (bm, HWc) output rows.
    """
    c = c_ref[...].astype(jnp.float32)
    s = s_ref[...].astype(jnp.float32)

    # one-pass sum / sum-of-squares stats (unbiased variance, like torch.var)
    c_sum = jnp.sum(c, axis=-1, keepdims=True)
    c_sq = jnp.sum(c * c, axis=-1, keepdims=True)
    c_mean = c_sum * (1.0 / hw_c)
    c_var = jnp.maximum((c_sq - c_sum * c_mean) * (1.0 / (hw_c - 1.0)), 0.0)

    s_sum = jnp.sum(s, axis=-1, keepdims=True)
    s_sq = jnp.sum(s * s, axis=-1, keepdims=True)
    s_mean = s_sum * (1.0 / hw_s)
    s_var = jnp.maximum((s_sq - s_sum * s_mean) * (1.0 / (hw_s - 1.0)), 0.0)

    scale = jnp.sqrt(s_var + eps) * lax.rsqrt(c_var + eps)      # (bm, 1)
    offset = s_mean - c_mean * scale                            # (bm, 1)
    o_ref[...] = (c * scale + offset).astype(o_ref.dtype)


# --------------------- chunked fallback kernels (path B) --------------------
def _row_stats_kernel(x_ref, mean_ref, var_ref, sum_sc, sq_sc, *, hw, bhw, ragged):
    """Accumulate per-row sum / sum-of-squares over lane chunks (grid axis 1),
    finalize mean / unbiased var at the last chunk."""
    j = pl.program_id(1)

    @pl.when(j == 0)
    def _():
        sum_sc[...] = jnp.zeros_like(sum_sc)
        sq_sc[...] = jnp.zeros_like(sq_sc)

    x = x_ref[...].astype(jnp.float32)
    if ragged:  # static: mask out-of-bounds lanes of the last chunk
        col = lax.broadcasted_iota(jnp.int32, x.shape, 1) + j * bhw
        x = jnp.where(col < hw, x, 0.0)

    sum_sc[...] += jnp.sum(x, axis=-1, keepdims=True)
    sq_sc[...] += jnp.sum(x * x, axis=-1, keepdims=True)

    @pl.when(j == pl.num_programs(1) - 1)
    def _():
        s = sum_sc[...]
        mean = s * (1.0 / hw)
        var = jnp.maximum((sq_sc[...] - s * mean) * (1.0 / (hw - 1.0)), 0.0)
        mean_ref[...] = mean
        var_ref[...] = var


def _apply_affine_kernel(c_ref, scale_ref, offset_ref, o_ref):
    c = c_ref[...].astype(jnp.float32)
    o_ref[...] = (c * scale_ref[...] + offset_ref[...]).astype(o_ref.dtype)


# ------------------------------ block sizing --------------------------------
def _round_up(x, m):
    return ((x + m - 1) // m) * m


def _row_align(dtype):
    # sublane packing: 8 rows/vreg for 32-bit, 16 for 16-bit, 32 for 8-bit
    return max(8, 32 // jnp.dtype(dtype).itemsize)


def _vmem_budget_and_limit():
    """Generation-aware (budget_for_pipeline_blocks, scoped_vmem_limit)."""
    try:
        phys = int(pltpu.get_tpu_info().vmem_capacity_bytes)
    except Exception:
        phys = None
    if phys is None or phys <= 0:
        phys = 64 << 20                      # conservative (v7x-class per-core)
    if phys >= (96 << 20):                   # v5e / v6e: 128 MiB physical
        return 96 << 20, 112 << 20
    # v7x-class (64 MiB) or smaller: leave headroom for compiler temporaries.
    return int(phys * 0.62), int(phys * 0.75)


def _pick_block_rows(nc, bytes_per_row, budget, align):
    """Row-block size for the fused kernel, or None if even `align` rows at
    full spatial width overflow the budget (-> chunked path)."""
    max_rows = (budget // max(bytes_per_row, 1)) // align * align
    if max_rows < align:
        return None
    # Target ~8 grid steps so the BlockSpec pipeline overlaps DMA with compute
    # and v7x can shard the parallel axis across both TensorCores, but never
    # shrink a block below the sublane alignment.
    target_steps = 8
    bm = min(max_rows,
             max(align, _round_up(pl.cdiv(nc, target_steps), align)),
             _round_up(nc, align))
    # Prefer an aligned divisor of nc in [bm/2, bm] (no masked boundary rows);
    # otherwise keep bm and let Pallas mask the ragged last row block.
    for cand in range(bm, max(align, bm // 2) - 1, -align):
        if nc % cand == 0:
            return cand
    return bm


def _pick_chunk_blocks(hw_c, hw_s, itemsize, budget, align):
    """Fallback tiling: small row blocks x large lane chunks.  Per-element
    cost ~= double-buffered in+out tiles in the input dtype + one f32 copy."""
    per_elem = 4 * itemsize + 4
    elems = max(budget // per_elem, align * 128)
    bm = align
    lane_budget = max(128, (elems // bm) // 128 * 128)
    bhw_c = hw_c if lane_budget >= hw_c else lane_budget
    bhw_s = hw_s if lane_budget >= hw_s else lane_budget
    return bm, bhw_c, bhw_s


# ------------------------------ host wrappers --------------------------------
def _row_stats(x2d, nc, hw, bm, bhw, limit):
    ragged = (hw % bhw) != 0
    kernel = functools.partial(_row_stats_kernel, hw=hw, bhw=bhw, ragged=ragged)
    mean, var = pl.pallas_call(
        kernel,
        out_shape=(jax.ShapeDtypeStruct((nc, 1), jnp.float32),
                   jax.ShapeDtypeStruct((nc, 1), jnp.float32)),
        grid=(pl.cdiv(nc, bm), pl.cdiv(hw, bhw)),
        in_specs=[pl.BlockSpec((bm, bhw), lambda i, j: (i, j))],
        out_specs=[pl.BlockSpec((bm, 1), lambda i, j: (i, 0)),
                   pl.BlockSpec((bm, 1), lambda i, j: (i, 0))],
        scratch_shapes=[pltpu.VMEM((bm, 1), jnp.float32),
                        pltpu.VMEM((bm, 1), jnp.float32)],
        compiler_params=pltpu.CompilerParams(
            dimension_semantics=("parallel", "arbitrary"),
            vmem_limit_bytes=limit),
    )(x2d)
    return mean, var


def _adain_chunked(c2d, s2d, nc, hw_c, hw_s, eps, budget, limit, align,
                   out_dtype, itemsize):
    bm, bhw_c, bhw_s = _pick_chunk_blocks(hw_c, hw_s, itemsize, budget, align)
    c_mean, c_var = _row_stats(c2d, nc, hw_c, bm, bhw_c, limit)
    s_mean, s_var = _row_stats(s2d, nc, hw_s, bm, bhw_s, limit)
    # Tiny (nc, 1) arithmetic: leave to XLA.
    scale = jnp.sqrt(s_var + eps) * lax.rsqrt(c_var + eps)
    offset = s_mean - c_mean * scale
    return pl.pallas_call(
        _apply_affine_kernel,
        out_shape=jax.ShapeDtypeStruct((nc, hw_c), out_dtype),
        grid=(pl.cdiv(nc, bm), pl.cdiv(hw_c, bhw_c)),
        in_specs=[pl.BlockSpec((bm, bhw_c), lambda i, j: (i, j)),
                  pl.BlockSpec((bm, 1), lambda i, j: (i, 0)),
                  pl.BlockSpec((bm, 1), lambda i, j: (i, 0))],
        out_specs=pl.BlockSpec((bm, bhw_c), lambda i, j: (i, j)),
        compiler_params=pltpu.CompilerParams(
            dimension_semantics=("parallel", "parallel"),
            vmem_limit_bytes=limit),
    )(c2d, scale, offset)


def adaptive_instance_norm(content, style, epsilon=EPSILON, *,
                           _block_budget_bytes=None):
    """AdaptiveInstanceNorm.forward. NCHW in, NCHW out (style HxW may differ)."""
    n, c, hc, wc = content.shape
    ns, cs, hs, ws = style.shape
    assert (n, c) == (ns, cs), "content/style must share (N, C)"
    nc = n * c
    hw_c = hc * wc
    hw_s = hs * ws
    assert hw_c > 1 and hw_s > 1, "unbiased variance needs H*W > 1"

    # Free contiguous reshapes: rows = (n, c) pairs, lanes = spatial.
    c2d = content.reshape(nc, hw_c)
    s2d = style.reshape(nc, hw_s)
    out_dtype = content.dtype

    budget, limit = _vmem_budget_and_limit()
    if _block_budget_bytes is not None:      # test hook: force the chunked path
        budget = _block_budget_bytes

    isz_c = jnp.dtype(content.dtype).itemsize
    isz_s = jnp.dtype(style.dtype).itemsize
    align = max(_row_align(content.dtype), _row_align(style.dtype))

    # double-buffered in/out pipeline tiles (input dtype) + in-kernel f32 temps
    nbuf = 2
    bytes_per_row = nbuf * (2 * hw_c * isz_c + hw_s * isz_s) + (hw_c + hw_s) * 4
    bm = _pick_block_rows(nc, bytes_per_row, budget, align)

    if bm is None:
        # Rows too wide for even an `align`-row block: chunk the spatial axis.
        out2d = _adain_chunked(c2d, s2d, nc, hw_c, hw_s, float(epsilon),
                               budget, limit, align, out_dtype,
                               max(isz_c, isz_s))
    else:
        kernel = functools.partial(_adain_kernel, hw_c=hw_c, hw_s=hw_s,
                                   eps=float(epsilon))
        # NOTE: on v6e/v5e there is VMEM headroom for pipeline_mode=
        # pl.Buffered(3) on the inputs if profiling shows exposed DMA; keep the
        # default depth-2 here (a clear win only case-by-case, and a loss on
        # v7x's 64 MiB).
        out2d = pl.pallas_call(
            kernel,
            out_shape=jax.ShapeDtypeStruct((nc, hw_c), out_dtype),
            grid=(pl.cdiv(nc, bm),),
            in_specs=[pl.BlockSpec((bm, hw_c), lambda i: (i, 0)),
                      pl.BlockSpec((bm, hw_s), lambda i: (i, 0))],
            out_specs=pl.BlockSpec((bm, hw_c), lambda i: (i, 0)),
            compiler_params=pltpu.CompilerParams(
                dimension_semantics=("parallel",),
                vmem_limit_bytes=limit),
        )(c2d, s2d)

    return out2d.reshape(n, c, hc, wc)


# ---------------- pure-JAX reference (for verification only) ----------------
def adain_ref(content, style, epsilon=EPSILON):
    c_mean = jnp.mean(content, axis=(2, 3), keepdims=True)
    c_var = jnp.var(content, axis=(2, 3), keepdims=True, ddof=1)
    s_mean = jnp.mean(style, axis=(2, 3), keepdims=True)
    s_var = jnp.var(style, axis=(2, 3), keepdims=True, ddof=1)
    return jnp.sqrt(s_var + epsilon) * (content - c_mean) / jnp.sqrt(c_var + epsilon) + s_mean


if __name__ == "__main__":
    key = jax.random.PRNGKey(0)
    kc, ks, kc2, ks2, kc3, ks3 = jax.random.split(key, 6)

    # 1) main small f32 test — fused single-call path
    N, C, H, W = 2, 4, 16, 16
    content = jax.random.normal(kc, (N, C, H, W), jnp.float32) * 2.0 + 0.5
    style = jax.random.normal(ks, (N, C, H, W), jnp.float32) * 0.7 - 1.0
    out = jax.block_until_ready(jax.jit(adaptive_instance_norm)(content, style))
    assert out.shape == (N, C, H, W), out.shape
    np.testing.assert_allclose(np.asarray(out), np.asarray(adain_ref(content, style)),
                               rtol=1e-4, atol=1e-4)

    # 2) bf16 test with a different style spatial size (16-row alignment path)
    c_bf = (jax.random.normal(kc2, (2, 16, 16, 16), jnp.float32) * 1.5 + 0.3).astype(jnp.bfloat16)
    s_bf = (jax.random.normal(ks2, (2, 16, 8, 8), jnp.float32) * 0.5 - 0.2).astype(jnp.bfloat16)
    out_bf = jax.block_until_ready(jax.jit(adaptive_instance_norm)(c_bf, s_bf))
    ref_bf = adain_ref(c_bf.astype(jnp.float32), s_bf.astype(jnp.float32))
    np.testing.assert_allclose(np.asarray(out_bf.astype(jnp.float32)),
                               np.asarray(ref_bf.astype(jnp.bfloat16).astype(jnp.float32)),
                               rtol=2e-2, atol=2e-2)

    # 3) chunked-fallback path (forced tiny budget): ragged rows (NC=10) and
    #    ragged lane chunks (H*W=324, chunk 128) to exercise the masking.
    c3 = jax.random.normal(kc3, (2, 5, 18, 18), jnp.float32) * 1.2 + 0.1
    s3 = jax.random.normal(ks3, (2, 5, 18, 18), jnp.float32) * 0.9 + 0.4
    forced = jax.jit(functools.partial(adaptive_instance_norm,
                                       _block_budget_bytes=16 * 1024))
    out3 = jax.block_until_ready(forced(c3, s3))
    np.testing.assert_allclose(np.asarray(out3), np.asarray(adain_ref(c3, s3)),
                               rtol=1e-4, atol=1e-4)

    print("KERNEL_OK")
</pallas_src>

<mosaic_0001>
module attributes {stable_mosaic.version = 11 : i64} {
  func.func @_adain_kernel(%arg0: i32, %arg1: memref<8x256xf32, #tpu.memory_space<vmem>>, %arg2: memref<8x256xf32, #tpu.memory_space<vmem>>, %arg3: memref<8x256xf32, #tpu.memory_space<vmem>>) attributes {dimension_semantics = [#tpu.dimension_semantics<parallel>], iteration_bounds = array<i64: 1>, scalar_prefetch = 0 : i64, scratch_operands = 0 : i64, tpu.core_type = #tpu.core_type<tc>, window_params = [{transform_indices = @transform_0, window_bounds = array<i64: 8, 256>}, {transform_indices = @transform_1, window_bounds = array<i64: 8, 256>}, {transform_indices = @transform_2, window_bounds = array<i64: 8, 256>}]} {
    %c0 = arith.constant 0 : index
    %c0_0 = arith.constant 0 : index
    %0 = vector.load %arg1[%c0, %c0_0] : memref<8x256xf32, #tpu.memory_space<vmem>>, vector<8x256xf32>
    %c0_1 = arith.constant 0 : index
    %c0_2 = arith.constant 0 : index
    %1 = vector.load %arg2[%c0_1, %c0_2] : memref<8x256xf32, #tpu.memory_space<vmem>>, vector<8x256xf32>
    %cst = arith.constant dense<0.000000e+00> : vector<8xf32>
    %2 = vector.multi_reduction <add>, %0, %cst [1] : vector<8x256xf32> to vector<8xf32>
    %3 = vector.shape_cast %2 : vector<8xf32> to vector<8x1xf32>
    %4 = arith.mulf %0, %0 : vector<8x256xf32>
    %cst_3 = arith.constant dense<0.000000e+00> : vector<8xf32>
    %5 = vector.multi_reduction <add>, %4, %cst_3 [1] : vector<8x256xf32> to vector<8xf32>
    %6 = vector.shape_cast %5 : vector<8xf32> to vector<8x1xf32>
    %cst_4 = arith.constant 3.906250e-03 : f32
    %7 = vector.broadcast %cst_4 : f32 to vector<8x1xf32>
    %8 = arith.mulf %3, %7 : vector<8x1xf32>
    %9 = arith.mulf %3, %8 : vector<8x1xf32>
    %10 = arith.subf %6, %9 : vector<8x1xf32>
    %cst_5 = arith.constant 0.00392156886 : f32
    %11 = vector.broadcast %cst_5 : f32 to vector<8x1xf32>
    %12 = arith.mulf %10, %11 : vector<8x1xf32>
    %cst_6 = arith.constant 0.000000e+00 : f32
    %13 = vector.broadcast %cst_6 : f32 to vector<8x1xf32>
    %14 = arith.maximumf %12, %13 : vector<8x1xf32>
    %cst_7 = arith.constant dense<0.000000e+00> : vector<8xf32>
    %15 = vector.multi_reduction <add>, %1, %cst_7 [1] : vector<8x256xf32> to vector<8xf32>
    %16 = vector.shape_cast %15 : vector<8xf32> to vector<8x1xf32>
    %17 = arith.mulf %1, %1 : vector<8x256xf32>
    %cst_8 = arith.constant dense<0.000000e+00> : vector<8xf32>
    %18 = vector.multi_reduction <add>, %17, %cst_8 [1] : vector<8x256xf32> to vector<8xf32>
    %19 = vector.shape_cast %18 : vector<8xf32> to vector<8x1xf32>
    %cst_9 = arith.constant 3.906250e-03 : f32
    %20 = vector.broadcast %cst_9 : f32 to vector<8x1xf32>
    %21 = arith.mulf %16, %20 : vector<8x1xf32>
    %22 = arith.mulf %16, %21 : vector<8x1xf32>
    %23 = arith.subf %19, %22 : vector<8x1xf32>
    %cst_10 = arith.constant 0.00392156886 : f32
    %24 = vector.broadcast %cst_10 : f32 to vector<8x1xf32>
    %25 = arith.mulf %23, %24 : vector<8x1xf32>
    %cst_11 = arith.constant 0.000000e+00 : f32
    %26 = vector.broadcast %cst_11 : f32 to vector<8x1xf32>
    %27 = arith.maximumf %25, %26 : vector<8x1xf32>
    %cst_12 = arith.constant 9.99999974E-6 : f32
    %28 = vector.broadcast %cst_12 : f32 to vector<8x1xf32>
    %29 = arith.addf %27, %28 : vector<8x1xf32>
    %30 = math.sqrt %29 : vector<8x1xf32>
    %cst_13 = arith.constant 9.99999974E-6 : f32
    %31 = vector.broadcast %cst_13 : f32 to vector<8x1xf32>
    %32 = arith.addf %14, %31 : vector<8x1xf32>
    %33 = math.rsqrt %32 : vector<8x1xf32>
    %34 = arith.mulf %30, %33 : vector<8x1xf32>
    %35 = arith.mulf %8, %34 : vector<8x1xf32>
    %36 = arith.subf %21, %35 : vector<8x1xf32>
    %37 = vector.broadcast %34 : vector<8x1xf32> to vector<8x256xf32>
    %38 = arith.mulf %0, %37 : vector<8x256xf32>
    %39 = vector.broadcast %36 : vector<8x1xf32> to vector<8x256xf32>
    %40 = arith.addf %38, %39 : vector<8x256xf32>
    %c0_14 = arith.constant 0 : index
    %c0_15 = arith.constant 0 : index
    %41 = vector.load %arg3[%c0_14, %c0_15] : memref<8x256xf32, #tpu.memory_space<vmem>>, vector<8x256xf32>
    tpu.vector_store %arg3[%c0_14, %c0_15], %40 {strides = array<i32>} : memref<8x256xf32, #tpu.memory_space<vmem>>, vector<8x256xf32>,
    return
  }
  func.func @transform_0(%arg0: i32) -> (i32, i32) {
    %c0_i32 = arith.constant 0 : i32
    %c0_i32_0 = arith.constant 0 : i32
    return %arg0, %c0_i32 : i32, i32
  }
  func.func @transform_1(%arg0: i32) -> (i32, i32) {
    %c0_i32 = arith.constant 0 : i32
    %c0_i32_0 = arith.constant 0 : i32
    return %arg0, %c0_i32 : i32, i32
  }
  func.func @transform_2(%arg0: i32) -> (i32, i32) {
    %c0_i32 = arith.constant 0 : i32
    %c0_i32_0 = arith.constant 0 : i32
    return %arg0, %c0_i32 : i32, i32
  }
}

</mosaic_0001>

<llo_original>
// kernel: adaptive_instance_norm.1
$region0: #{adaptive_instance_norm.1}
  #allocation0 [shape = 'u32[]', space=smem, size = 0x4, offset = 0x4, fixed_abs, tag = 'smem constant byte address 0x4 - core index']
  #allocation1 [shape = 'u32[144,128]{1,0:T(1,128)}', space=vmem, size = 0x12000, scoped, tag = 'internal scratch']
  %s0 = inlined_call_operand.vmem [shape: f32[8,256], index: 0, kind: input, shape index: {}]
  %s1 = inlined_call_operand.vmem [shape: f32[8,256], index: 1, kind: input, shape index: {}]
  %s2 = inlined_call_operand.vmem [shape: f32[8,256], index: 2, kind: output, shape index: {}]
  %s3 = sld [smem:[#allocation0]]
  $region18: #{adaptive_instance_norm.1} parent=0
    _
  %s5 = ssub.s32 1, %s3
  %s6 = scalar_select 0, %s5, %s3
  // Predicated region
  $region2: #{adaptive_instance_norm.1} parent=0 // pred_check
    _
  $region3: #{adaptive_instance_norm.1} parent=0 // pred_check_branch
    %8 = sbr.rel (0) target = $region5
  $region4: #{adaptive_instance_norm.1} parent=0 // pred_region
    _
  $region5: #{adaptive_instance_norm.1} parent=0 // pred_fallthru
    _
  // Predicated region
  $region6: #{adaptive_instance_norm.1} parent=0 // pred_check
    _
  $region7: #{adaptive_instance_norm.1} parent=0 // pred_check_branch
    %10 = sbr.rel (0) target = $region9
  $region8: #{adaptive_instance_norm.1} parent=0 // pred_region
    _
  $region9: #{adaptive_instance_norm.1} parent=0 // pred_fallthru
    _
  %v11 = vld [vmem:[%s0] sm:$0xff]
  %v12 = vld [vmem:[%s0 + $0x8] sm:$0xff]
  %v13 = vld [vmem:[%s1] sm:$0xff]
  %v14 = vld [vmem:[%s1 + $0x8] sm:$0xff]
  %v15 = vadd.f32 %v11, %v12
  %16 = vadd.xlane.f32.xlu0 %v15
  %v17 = vpop.xlane.xlu0 %16
  %v18 = vmul.f32 %v11, %v11
  %v19 = vmul.f32 %v12, %v12
  %v20 = vadd.f32 %v18, %v19
  %21 = vadd.xlane.f32.xlu0 %v20
  %v22 = vpop.xlane.xlu0 %21
  %v23 = vmul.f32 %v17, 0.00390625
  %v24 = vmul.f32 %v17, %v23
  %v25 = vsub.f32 %v22, %v24
  %v26 = vmul.f32 %v25, 0.003921569
  %v27 = vmax.f32 %v26, 0.0
  %v28 = vadd.f32 %v13, %v14
  %29 = vadd.xlane.f32.xlu0 %v28
  %v30 = vpop.xlane.xlu0 %29
  %v31 = vmul.f32 %v13, %v13
  %v32 = vmul.f32 %v14, %v14
  %v33 = vadd.f32 %v31, %v32
  %34 = vadd.xlane.f32.xlu0 %v33
  %v35 = vpop.xlane.xlu0 %34
  %v36 = vmul.f32 %v30, 0.00390625
  %v37 = vmul.f32 %v30, %v36
  %v38 = vsub.f32 %v35, %v37
  %v39 = vmul.f32 %v38, 0.003921569
  %v40 = vmax.f32 %v39, 0.0
  %v41 = vadd.f32 %v40, 1e-05
  %v42 = vrsqrt.pop %v41
  %v43 = vmul.f32 %v41, %v42
  %vm44 = vcmp.eq.f32.partialorder %v41, inf
  %v45 = vsel %vm44, %v41, %v43
  %vm46 = vcmp.eq.f32.partialorder %v41, 0.0
  %v47 = vand.u32 %v41, 2147483648
  %v48 = vsel %vm46, %v47, %v45
  %v49 = vadd.f32 %v27, 1e-05
  %v50 = vrsqrt.pop %v49
  %v51 = vmul.f32 %v48, %v50
  %v52 = vmul.f32 %v23, %v51
  %v53 = vsub.f32 %v36, %v52
  %v54 = vmul.f32 %v11, %v51
  %v55 = vmul.f32 %v12, %v51
  %v56 = vadd.f32 %v54, %v53
  %v57 = vadd.f32 %v55, %v53
  %58 = vst [vmem:[%s2] sm:$0xff] %v56
  %59 = vst [vmem:[%s2 + $0x8] sm:$0xff] %v57
  // Predicated region
  $region10: #{adaptive_instance_norm.1} parent=0 // pred_check
    _
  $region11: #{adaptive_instance_norm.1} parent=0 // pred_check_branch
    %61 = sbr.rel (0) target = $region13
  $region12: #{adaptive_instance_norm.1} parent=0 // pred_region
    _
  $region13: #{adaptive_instance_norm.1} parent=0 // pred_fallthru
    _
  // Predicated region
  $region14: #{adaptive_instance_norm.1} parent=0 // pred_check
    _
  $region15: #{adaptive_instance_norm.1} parent=0 // pred_check_branch
    %63 = sbr.rel (0) target = $region17
  $region16: #{adaptive_instance_norm.1} parent=0 // pred_region
    _
  $region17: #{adaptive_instance_norm.1} parent=0 // pred_fallthru
    _

</llo_original>
